<compile_context>
chip_gen: v7x
topology: tpu7x:2x2x1
jax: 0.10.0
libtpu: 0.0.40
codegen_flags: <defaults>
</compile_context>

<pallas_src>
import functools

import jax
import jax.numpy as jnp
import numpy as np
from jax import lax
from jax.experimental import pallas as pl
from jax.experimental.pallas import tpu as pltpu


def _mulrel_kernel(emb_ref, mask_ref, w_ref, out_ref, *, B, S, T):
    # emb_ref : (B*(S+T), D)  -- all src rows first, then all tar rows
    # mask_ref: (B, S+T)      -- src_mask | tar_mask, concatenated on last axis
    # w_ref   : (R, D)
    # out_ref : (B*S, D)
    R, D = w_ref.shape

    # --- F.normalize(mul_score_w) via rsqrt (EUP slot, prologue is serial). --
    w = w_ref[...].astype(jnp.float32)                               # (R, D)
    ssq = jnp.sum(w * w, axis=1, keepdims=True)                      # (R, 1)
    wn = w * lax.rsqrt(jnp.maximum(ssq, 1e-24))                      # (R, D)
    # ||wn_r||^2 (~1, kept for exactness vs. the reference); applied to the
    # src-side projection slice below with a single broadcast multiply.
    wn2 = jnp.sum(wn * wn, axis=1, keepdims=True)                    # (R, 1)

    # --- One fused projection: (src ++ tar) @ wn.T as a single MXU push. ----
    emb = emb_ref[...].astype(jnp.float32)                           # (B*(S+T), D)
    dn = (((1,), (1,)), ((), ()))                                    # contract D
    proj = lax.dot_general(emb, wn, dn,
                           preferred_element_type=jnp.float32)       # (B*(S+T), R)
    sw = proj[: B * S].reshape(B, S, R) * wn2.reshape(1, 1, R)       # (B, S, R)
    tw = proj[B * S:].reshape(B, T, R)                               # (B, T, R)

    # --- Mask bias (masks sliced from the merged (B, S+T) input). -----------
    mask = mask_ref[...].astype(jnp.float32)                         # (B, S+T)
    smask = mask[:, :S]                                              # (B, S)
    tmask = mask[:, S:]                                              # (B, T)
    bias = (1.0 - smask[:, :, None] * tmask[:, None, :]) * (-1e10)   # (B, S, T)

    # --- Score + softmax over the tar axis (axis=2).  (B, S, T, R) layout
    #     keeps the tar projection in its natural layout (no XLU transpose). --
    score = sw[:, :, None, :] * tw[:, None, :, :] + bias[:, :, :, None]
    m = jnp.max(score, axis=2, keepdims=True)
    e = jnp.exp(score - m)
    p = e * pl.reciprocal(jnp.sum(e, axis=2, keepdims=True), approx=True)

    # c[b, s, r] = sum_t p[b, s, t, r] * tw[b, t, r]
    c = jnp.sum(p * tw[:, None, :, :], axis=2)                       # (B, S, R)

    # out[b*S+s, d] = sum_r c[b, s, r] * wn[r, d]
    out = jnp.dot(c.reshape(B * S, R), wn,
                  preferred_element_type=jnp.float32)                # (B*S, D)
    out_ref[...] = out.astype(out_ref.dtype)


def mulrel_forward(src_emb, tar_emb, src_mask, tar_mask, mul_score_w):
    """MulRel.forward as one Pallas call (single grid step, fully resident)."""
    B, S, D = src_emb.shape
    _, T, _ = tar_emb.shape
    R, _ = mul_score_w.shape

    # Free XLA reshapes/concats in the wrapper: one embedding operand (one DMA)
    # and one mask operand (one DMA).
    emb2 = jnp.concatenate([src_emb.reshape(B * S, D),
                            tar_emb.reshape(B * T, D)], axis=0)      # (B*(S+T), D)
    mask2 = jnp.concatenate([src_mask, tar_mask], axis=1)            # (B, S+T)

    grid_spec = pltpu.PrefetchScalarGridSpec(
        num_scalar_prefetch=0,
        grid=(1,),
        # Block shapes equal the full array dims -> (8,128) rule satisfied.
        in_specs=[
            pl.BlockSpec((B * (S + T), D), lambda i: (0, 0)),
            pl.BlockSpec((B, S + T), lambda i: (0, 0)),
            pl.BlockSpec((R, D), lambda i: (0, 0)),
        ],
        out_specs=pl.BlockSpec((B * S, D), lambda i: (0, 0)),
    )

    flops = (2 * B * (S + T) * D * R          # fused projection
             + 2 * B * S * R * D              # final c @ wn
             + 8 * B * S * T * R)             # score / softmax / weighted sum
    transcendentals = B * S * T * R + B * S * R + R
    bytes_accessed = 4 * (B * (S + T) * D     # embeddings in
                          + B * (S + T)       # masks in
                          + R * D             # weight in
                          + B * S * D)        # output write

    kernel = functools.partial(_mulrel_kernel, B=B, S=S, T=T)
    out2 = pl.pallas_call(
        kernel,
        out_shape=jax.ShapeDtypeStruct((B * S, D), src_emb.dtype),
        grid_spec=grid_spec,
        compiler_params=pltpu.CompilerParams(
            dimension_semantics=("arbitrary",)),
        cost_estimate=pl.CostEstimate(
            flops=flops, transcendentals=transcendentals,
            bytes_accessed=bytes_accessed),
    )(emb2, mask2, mul_score_w)
    return out2.reshape(B, S, D)


def mulrel_reference(src_emb, tar_emb, src_mask, tar_mask, mul_score_w):
    """Pure-JAX reference mirroring the PyTorch forward."""
    norm = jnp.sqrt(jnp.sum(mul_score_w ** 2, axis=1, keepdims=True))
    wn = mul_score_w / jnp.maximum(norm, 1e-12)                      # (R, D)
    src_w = jnp.einsum("bsd,rd->brs", src_emb, wn)                   # (B, R, S)
    src_map = src_w[..., None] * wn[None, :, None, :]                # (B, R, S, D)
    tar_w = jnp.einsum("btd,rd->brt", tar_emb, wn)                   # (B, R, T)
    tar_map = tar_w[..., None] * wn[None, :, None, :]                # (B, R, T, D)
    score = jnp.einsum("brsd,brtd->brst", src_map, tar_map)          # (B, R, S, T)
    pair_mask = src_mask[:, :, None] * tar_mask[:, None, :]          # (B, S, T)
    score = score + ((1.0 - pair_mask) * (-1e10))[:, None, :, :]
    p = jax.nn.softmax(score, axis=3)                                # (B, R, S, T)
    emb = jnp.sum(p[..., None] * tar_map[:, :, None, :, :], axis=1)  # (B, S, T, D)
    return jnp.sum(emb, axis=2)                                      # (B, S, D)


if __name__ == "__main__":
    # Small shapes consistent with the module: batch=2, src_num=8, tar_num=8,
    # dim=32, rel_num=4.
    B, S, T, D, R = 2, 8, 8, 32, 4
    key = jax.random.PRNGKey(0)
    k1, k2, k3, k4, k5 = jax.random.split(key, 5)

    src_emb = jax.random.normal(k1, (B, S, D), dtype=jnp.float32)
    tar_emb = jax.random.normal(k2, (B, T, D), dtype=jnp.float32)
    # masks in {0, 1}, keep at least the first positions valid
    src_mask = (jax.random.uniform(k3, (B, S)) > 0.3).astype(jnp.float32)
    src_mask = src_mask.at[:, 0].set(1.0)
    tar_mask = (jax.random.uniform(k4, (B, T)) > 0.3).astype(jnp.float32)
    tar_mask = tar_mask.at[:, 0].set(1.0)
    # deterministic parameter init (synthetic; no checkpoint load)
    mul_score_w = jax.random.normal(k5, (R, D), dtype=jnp.float32) * 0.1

    out = mulrel_forward(src_emb, tar_emb, src_mask, tar_mask, mul_score_w)
    out = jax.block_until_ready(out)

    ref = mulrel_reference(src_emb, tar_emb, src_mask, tar_mask, mul_score_w)
    # Tolerance covers the EUP approximate reciprocal used in the softmax.
    np.testing.assert_allclose(np.asarray(out), np.asarray(ref),
                               rtol=5e-3, atol=5e-3)
    print("KERNEL_OK")
</pallas_src>

<mosaic_0001>
module attributes {stable_mosaic.version = 11 : i64} {
  func.func @_mulrel_kernel(%arg0: i32, %arg1: memref<32x32xf32, #tpu.memory_space<vmem>>, %arg2: memref<2x16xf32, #tpu.memory_space<vmem>>, %arg3: memref<4x32xf32, #tpu.memory_space<vmem>>, %arg4: memref<16x32xf32, #tpu.memory_space<vmem>>) attributes {dimension_semantics = [#tpu.dimension_semantics<arbitrary>], iteration_bounds = array<i64: 1>, scalar_prefetch = 0 : i64, scratch_operands = 0 : i64, tpu.core_type = #tpu.core_type<tc>, window_params = [{pipeline_mode = #tpu.pipeline_mode<synchronous>, transform_indices = @transform_0, window_bounds = array<i64: 32, 32>}, {pipeline_mode = #tpu.pipeline_mode<synchronous>, transform_indices = @transform_1, window_bounds = array<i64: 2, 16>}, {pipeline_mode = #tpu.pipeline_mode<synchronous>, transform_indices = @transform_2, window_bounds = array<i64: 4, 32>}, {pipeline_mode = #tpu.pipeline_mode<synchronous>, transform_indices = @transform_3, window_bounds = array<i64: 16, 32>}]} {
    %c0 = arith.constant 0 : index
    %c0_0 = arith.constant 0 : index
    %0 = vector.load %arg3[%c0, %c0_0] : memref<4x32xf32, #tpu.memory_space<vmem>>, vector<4x32xf32>
    %1 = arith.mulf %0, %0 : vector<4x32xf32>
    %cst = arith.constant dense<0.000000e+00> : vector<4xf32>
    %2 = vector.multi_reduction <add>, %1, %cst [1] : vector<4x32xf32> to vector<4xf32>
    %3 = vector.shape_cast %2 : vector<4xf32> to vector<4x1xf32>
    %cst_1 = arith.constant 1.000000e-24 : f32
    %4 = vector.broadcast %cst_1 : f32 to vector<4x1xf32>
    %5 = arith.maximumf %3, %4 : vector<4x1xf32>
    %6 = math.rsqrt %5 : vector<4x1xf32>
    %7 = vector.broadcast %6 : vector<4x1xf32> to vector<4x32xf32>
    %8 = arith.mulf %0, %7 : vector<4x32xf32>
    %9 = arith.mulf %8, %8 : vector<4x32xf32>
    %cst_2 = arith.constant dense<0.000000e+00> : vector<4xf32>
    %10 = vector.multi_reduction <add>, %9, %cst_2 [1] : vector<4x32xf32> to vector<4xf32>
    %11 = vector.shape_cast %10 : vector<4xf32> to vector<4x1xf32>
    %c0_3 = arith.constant 0 : index
    %c0_4 = arith.constant 0 : index
    %12 = vector.load %arg1[%c0_3, %c0_4] : memref<32x32xf32, #tpu.memory_space<vmem>>, vector<32x32xf32>
    %cst_5 = arith.constant dense<0.000000e+00> : vector<32x4xf32>
    %13 = tpu.matmul %12, %8, %cst_5 {dimension_numbers = #tpu.dot_dimension_numbers<[1], [1], [0], [0], [0, 0, 1, 0], [], []>} : vector<32x32xf32>, vector<4x32xf32>, vector<32x4xf32> -> vector<32x4xf32>
    %14 = vector.extract_strided_slice %13 {offsets = [0, 0], sizes = [16, 4], strides = [1, 1]} : vector<32x4xf32> to vector<16x4xf32>
    %15 = vector.shape_cast %14 : vector<16x4xf32> to vector<2x8x4xf32>
    %16 = vector.shape_cast %11 : vector<4x1xf32> to vector<1x1x4xf32>
    %17 = vector.broadcast %16 : vector<1x1x4xf32> to vector<2x8x4xf32>
    %18 = arith.mulf %15, %17 : vector<2x8x4xf32>
    %19 = vector.extract_strided_slice %13 {offsets = [16, 0], sizes = [16, 4], strides = [1, 1]} : vector<32x4xf32> to vector<16x4xf32>
    %20 = vector.shape_cast %19 : vector<16x4xf32> to vector<2x8x4xf32>
    %c0_6 = arith.constant 0 : index
    %c0_7 = arith.constant 0 : index
    %21 = vector.load %arg2[%c0_6, %c0_7] : memref<2x16xf32, #tpu.memory_space<vmem>>, vector<2x16xf32>
    %22 = vector.extract_strided_slice %21 {offsets = [0, 0], sizes = [2, 8], strides = [1, 1]} : vector<2x16xf32> to vector<2x8xf32>
    %23 = vector.extract_strided_slice %21 {offsets = [0, 8], sizes = [2, 8], strides = [1, 1]} : vector<2x16xf32> to vector<2x8xf32>
    %24 = vector.shape_cast %22 : vector<2x8xf32> to vector<2x8x1xf32>
    %25 = vector.shape_cast %23 : vector<2x8xf32> to vector<2x1x8xf32>
    %26 = vector.broadcast %24 : vector<2x8x1xf32> to vector<2x8x8xf32>
    %27 = vector.broadcast %25 : vector<2x1x8xf32> to vector<2x8x8xf32>
    %28 = arith.mulf %26, %27 : vector<2x8x8xf32>
    %cst_8 = arith.constant 1.000000e+00 : f32
    %29 = vector.broadcast %cst_8 : f32 to vector<2x8x8xf32>
    %30 = arith.subf %29, %28 : vector<2x8x8xf32>
    %cst_9 = arith.constant -1.000000e+10 : f32
    %31 = vector.broadcast %cst_9 : f32 to vector<2x8x8xf32>
    %32 = arith.mulf %30, %31 : vector<2x8x8xf32>
    %33 = vector.shape_cast %18 : vector<2x8x4xf32> to vector<2x8x1x4xf32>
    %34 = vector.shape_cast %20 : vector<2x8x4xf32> to vector<2x1x8x4xf32>
    %35 = vector.broadcast %33 : vector<2x8x1x4xf32> to vector<2x8x8x4xf32>
    %36 = vector.broadcast %34 : vector<2x1x8x4xf32> to vector<2x8x8x4xf32>
    %37 = arith.mulf %35, %36 : vector<2x8x8x4xf32>
    %38 = vector.shape_cast %32 : vector<2x8x8xf32> to vector<2x8x8x1xf32>
    %39 = vector.broadcast %38 : vector<2x8x8x1xf32> to vector<2x8x8x4xf32>
    %40 = arith.addf %37, %39 : vector<2x8x8x4xf32>
    %cst_10 = arith.constant dense<0xFF800000> : vector<2x8x4xf32>
    %41 = vector.multi_reduction <maximumf>, %40, %cst_10 [2] : vector<2x8x8x4xf32> to vector<2x8x4xf32>
    %42 = vector.shape_cast %41 : vector<2x8x4xf32> to vector<2x8x1x4xf32>
    %43 = vector.broadcast %42 : vector<2x8x1x4xf32> to vector<2x8x8x4xf32>
    %44 = arith.subf %40, %43 : vector<2x8x8x4xf32>
    %45 = math.exp %44 : vector<2x8x8x4xf32>
    %cst_11 = arith.constant dense<0.000000e+00> : vector<2x8x4xf32>
    %46 = vector.multi_reduction <add>, %45, %cst_11 [2] : vector<2x8x8x4xf32> to vector<2x8x4xf32>
    %47 = vector.shape_cast %46 : vector<2x8x4xf32> to vector<2x8x1x4xf32>
    %48 = tpu.reciprocal %47 {approx = true} : vector<2x8x1x4xf32> -> vector<2x8x1x4xf32>
    %49 = vector.broadcast %48 : vector<2x8x1x4xf32> to vector<2x8x8x4xf32>
    %50 = arith.mulf %45, %49 : vector<2x8x8x4xf32>
    %51 = vector.shape_cast %20 : vector<2x8x4xf32> to vector<2x1x8x4xf32>
    %52 = vector.broadcast %51 : vector<2x1x8x4xf32> to vector<2x8x8x4xf32>
    %53 = arith.mulf %50, %52 : vector<2x8x8x4xf32>
    %cst_12 = arith.constant dense<0.000000e+00> : vector<2x8x4xf32>
    %54 = vector.multi_reduction <add>, %53, %cst_12 [2] : vector<2x8x8x4xf32> to vector<2x8x4xf32>
    %55 = vector.shape_cast %54 : vector<2x8x4xf32> to vector<16x4xf32>
    %cst_13 = arith.constant dense<0.000000e+00> : vector<16x32xf32>
    %56 = tpu.matmul %55, %8, %cst_13 {dimension_numbers = #tpu.dot_dimension_numbers<[1], [0], [0], [1], [0, 0, 1, 1], [], []>} : vector<16x4xf32>, vector<4x32xf32>, vector<16x32xf32> -> vector<16x32xf32>
    %c0_14 = arith.constant 0 : index
    %c0_15 = arith.constant 0 : index
    %57 = vector.load %arg4[%c0_14, %c0_15] : memref<16x32xf32, #tpu.memory_space<vmem>>, vector<16x32xf32>
    tpu.vector_store %arg4[%c0_14, %c0_15], %56 {strides = array<i32>} : memref<16x32xf32, #tpu.memory_space<vmem>>, vector<16x32xf32>,
    return
  }
  func.func @transform_0(%arg0: i32) -> (i32, i32) {
    %c0_i32 = arith.constant 0 : i32
    %c0_i32_0 = arith.constant 0 : i32
    %c0_i32_1 = arith.constant 0 : i32
    return %c0_i32, %c0_i32_0 : i32, i32
  }
  func.func @transform_1(%arg0: i32) -> (i32, i32) {
    %c0_i32 = arith.constant 0 : i32
    %c0_i32_0 = arith.constant 0 : i32
    %c0_i32_1 = arith.constant 0 : i32
    return %c0_i32, %c0_i32_0 : i32, i32
  }
  func.func @transform_2(%arg0: i32) -> (i32, i32) {
    %c0_i32 = arith.constant 0 : i32
    %c0_i32_0 = arith.constant 0 : i32
    %c0_i32_1 = arith.constant 0 : i32
    return %c0_i32, %c0_i32_0 : i32, i32
  }
  func.func @transform_3(%arg0: i32) -> (i32, i32) {
    %c0_i32 = arith.constant 0 : i32
    %c0_i32_0 = arith.constant 0 : i32
    %c0_i32_1 = arith.constant 0 : i32
    return %c0_i32, %c0_i32_0 : i32, i32
  }
}

</mosaic_0001>

<llo_original>
// kernel: tpu_custom_call.1
$region0: #{tpu_custom_call.1}
  #allocation0 [shape = 'u32[]', space=smem, size = 0x4, offset = 0x4, fixed_abs, tag = 'smem constant byte address 0x4 - core index']
  #allocation1 [shape = 'u32[144,128]{1,0:T(1,128)}', space=vmem, size = 0x12000, scoped, tag = 'internal scratch']
  %s0 = inlined_call_operand.hbm [shape: f32[32,32], index: 0, kind: input, shape index: {}]
  %s1 = inlined_call_operand.vmem [shape: f32[2,16], index: 1, kind: input, shape index: {}]
  %s2 = inlined_call_operand.vmem [shape: f32[4,32], index: 2, kind: input, shape index: {}]
  %s3 = inlined_call_operand.hbm [shape: f32[16,32], index: 3, kind: output, shape index: {}]
  %s4 = sld [smem:[#allocation0]]
  $region26: #{tpu_custom_call.1} parent=0
    _
  %s6 = ssub.s32 1, %s4
  %s7 = scalar_select 0, %s6, %s4
  $region1: #{tpu_custom_call.1} parent=0
    #allocation2 [shape = 'u8[16384]{0}', space=vmem, size = 0x4000, scoped, tag = 'input window, operand 0, single buffered']
    #allocation3 [shape = 's32[1]{0}', space=sflag, size = 0x4, scoped, tag = 'scoped memory for tpu_custom_call.1']
    #allocation4 [shape = 's32[1]{0}', space=sflag, size = 0x4, scoped, tag = 'scoped memory for tpu_custom_call.1']
    #allocation5 [shape = 'u8[8192]{0}', space=vmem, size = 0x2000, scoped, tag = 'output window, operand 0, single buffered']
    %8 = vsyncpa [#allocation3], 0
    %9 = vsyncpa [#allocation4], 0
    // Predicated region
    $region2: #{tpu_custom_call.1} parent=1 // pred_check
      _
    $region3: #{tpu_custom_call.1} parent=1 // pred_check_branch
      %11 = sbr.rel (0) target = $region5
    $region4: #{tpu_custom_call.1} parent=1 // pred_region
      %s13 = ssub.s32 512, 512
      %14 = vsyncadd [#allocation3], %s13
      %s15 = sshll.u32 [#allocation2], 4
      %s16 = int_to_ptr.vmem [resolvable:$true] %s15
      %21 = dma.hbm_to_vmem [thread:$0]  %s0, 512, %s16, [#allocation3], 128, 128, 8
    $region5: #{tpu_custom_call.1} parent=1 // pred_fallthru
      _
    // Predicated region
    $region6: #{tpu_custom_call.1} parent=1 // pred_check
      _
    $region7: #{tpu_custom_call.1} parent=1 // pred_check_branch
      %23 = sbr.rel (0) target = $region9
    $region8: #{tpu_custom_call.1} parent=1 // pred_region
      _
    $region9: #{tpu_custom_call.1} parent=1 // pred_fallthru
      _
    // Predicated region
    $region10: #{tpu_custom_call.1} parent=1 // pred_check
      _
    $region11: #{tpu_custom_call.1} parent=1 // pred_check_branch
      %25 = sbr.rel (0) target = $region13
    $region12: #{tpu_custom_call.1} parent=1 // pred_region
      _
    $region13: #{tpu_custom_call.1} parent=1 // pred_fallthru
      _
    // Predicated region
    $region14: #{tpu_custom_call.1} parent=1 // pred_check
      _
    $region15: #{tpu_custom_call.1} parent=1 // pred_check_branch
      %27 = sbr.rel (0) target = $region17
    $region16: #{tpu_custom_call.1} parent=1 // pred_region
      %28 = dma.done [#allocation3], 512
    $region17: #{tpu_custom_call.1} parent=1 // pred_fallthru
      _
    %v29 = vld [vmem:[%s2] sm:$0xf]
    %v30 = vmul.f32 %v29, %v29
    %vm31 = vcmask 257024
    %v32 = vsel %vm31, %v30, 0.0
    %33 = vadd.xlane.f32.xlu0 %v32
    %v34 = vpop.xlane.xlu0 %33
    %v35 = vmax.f32 %v34, 1e-24
    %v36 = vrsqrt.pop %v35
    %v37 = vmul.f32 %v29, %v36
    %v38 = vmul.f32 %v37, %v37
    %v39 = vsel %vm31, %v38, 0.0
    %40 = vadd.xlane.f32.xlu0 %v39
    %v41 = vpop.xlane.xlu0 %40
    %v42 = vld [vmem:[#allocation2] sm:$0xff]
    %v43 = vld [vmem:[#allocation2 + $0x8] sm:$0xff]
    %v44 = vld [vmem:[#allocation2 + $0x10] sm:$0xff]
    %v45 = vld [vmem:[#allocation2 + $0x18] sm:$0xff]
    %vm46 = vcmask 261120
    %v48 = vsel %vm46, %v42, 0
    %v51 = vsel %vm46, %v43, 0
    %v54 = vsel %vm46, %v44, 0
    %v57 = vsel %vm46, %v45, 0
    %v60 = vsel %vm46, %v37, 0
    %62 = vmatprep.subr.mxu0 0.0
    %63 = vmatpush1.xpose.msra.mxu0 %v60
    %64 = vmatprep.subr.mxu0 0.0
    %65 = vmatpush1.xpose.msra.mxu0 0.0
    %66 = vmatprep.subr.mxu0 0.0
    %67 = vmatpush1.xpose.msra.mxu0 0.0
    %68 = vmatprep.subr.mxu0 0.0
    %69 = vmatpush1.xpose.msra.mxu0 0.0
    %70 = vmatprep.subr.mxu0 0.0
    %71 = vmatpush1.xpose.msra.mxu0 0.0
    %72 = vmatprep.subr.mxu0 0.0
    %73 = vmatpush1.xpose.msra.mxu0 0.0
    %74 = vmatprep.subr.mxu0 0.0
    %75 = vmatpush1.xpose.msra.mxu0 0.0
    %76 = vmatprep.subr.mxu0 0.0
    %77 = vmatpush1.xpose.msra.mxu0 0.0
    %78 = vmatprep.subr.mxu0 0.0
    %79 = vmatpush1.xpose.msra.mxu0 0.0
    %80 = vmatprep.subr.mxu0 0.0
    %81 = vmatpush1.xpose.msra.mxu0 0.0
    %82 = vmatprep.subr.mxu0 0.0
    %83 = vmatpush1.xpose.msra.mxu0 0.0
    %84 = vmatprep.subr.mxu0 0.0
    %85 = vmatpush1.xpose.msra.mxu0 0.0
    %86 = vmatprep.subr.mxu0 0.0
    %87 = vmatpush1.xpose.msra.mxu0 0.0
    %88 = vmatprep.subr.mxu0 0.0
    %89 = vmatpush1.xpose.msra.mxu0 0.0
    %90 = vmatprep.subr.mxu0 0.0
    %91 = vmatpush1.xpose.msra.mxu0 0.0
    %92 = vmatprep.subr.mxu0 0.0
    %93 = vmatpush1.xpose.msra.mxu0 0.0
    %94 = vmatprep.subr.mxu0 0.0
    %95 = vmatpush1.xpose.msra.mxu0 0.0
    %96 = vmatprep.subr.mxu0 0.0
    %97 = vmatpush1.xpose.msra.mxu0 0.0
    %98 = vmatprep.subr.mxu0 0.0
    %99 = vmatpush1.xpose.msra.mxu0 0.0
    %100 = vmatprep.subr.mxu0 0.0
    %101 = vmatpush1.xpose.msra.mxu0 0.0
    %102 = vmatprep.subr.mxu0 0.0
    %103 = vmatpush1.xpose.msra.mxu0 0.0
    %104 = vmatprep.subr.mxu0 0.0
    %105 = vmatpush1.xpose.msra.mxu0 0.0
    %106 = vmatprep.subr.mxu0 0.0
    %107 = vmatpush1.xpose.msra.mxu0 0.0
    %108 = vmatprep.subr.mxu0 0.0
    %109 = vmatpush1.xpose.msra.mxu0 0.0
    %110 = vmatprep.subr.mxu0 0.0
    %111 = vmatpush1.xpose.msra.mxu0 0.0
    %112 = vmatprep.subr.mxu0 0.0
    %113 = vmatpush1.xpose.msra.mxu0 0.0
    %114 = vmatprep.subr.mxu0 0.0
    %115 = vmatpush1.xpose.msra.mxu0 0.0
    %116 = vmatprep.subr.mxu0 0.0
    %117 = vmatpush1.xpose.msra.mxu0 0.0
    %118 = vmatprep.subr.mxu0 0.0
    %119 = vmatpush1.xpose.msra.mxu0 0.0
    %120 = vmatprep.subr.mxu0 0.0
    %121 = vmatpush1.xpose.msra.mxu0 0.0
    %122 = vmatprep.subr.mxu0 0.0
    %123 = vmatpush1.xpose.msra.mxu0 0.0
    %124 = vmatprep.subr.mxu0 0.0
    %125 = vmatpush1.xpose.msra.mxu0 0.0
    %126 = vmatprep.mubr.f32.mxu0 0.0
    %127 = vmatmul.mubr.f32.gmra.mrb[0].mxu0 %v48
    %v128 = vpop.f32.mrb[0].mxu0
    %v129 = vadd.f32 0.0, %v128
    %v130 = vpop.f32.mrb[0].mxu0
    %131 = vmatprep.mubr.f32.mxu0 0.0
    %132 = vmatmul.mubr.f32.gmra.mrb[0].mxu0 %v51
    %v133 = vpop.f32.mrb[0].mxu0
    %v134 = vadd.f32 0.0, %v133
    %v135 = vpop.f32.mrb[0].mxu0
    %136 = vmatprep.mubr.f32.mxu0 0.0
    %137 = vmatmul.mubr.f32.gmra.mrb[0].mxu0 %v54
    %v138 = vpop.f32.mrb[0].mxu0
    %v139 = vadd.f32 0.0, %v138
    %v140 = vpop.f32.mrb[0].mxu0
    %141 = vmatprep.mubr.f32.mxu0 0.0
    %142 = vmatmul.mubr.f32.gmra.mrb[0].mxu0 %v57
    %v143 = vpop.f32.mrb[0].mxu0
    %v144 = vadd.f32 0.0, %v143
    %v145 = vpop.f32.mrb[0].mxu0
    %146 = vdwg.mxu0
    %v148 = vlaneseq
    %v149 = vand.u32 %v148, 127
    %v150 = vlaneseq
    %v151 = vshrl.u32 %v150, 7
    %v152 = vsub.s32 %v149, %v151
    %v153 = vrot.slane %v41, %v152
    %vm154 = vcmask 1041409
    %vm155 = vcmask 1042434
    %v156 = vsel %vm155, %v153, %v153
    %vm157 = vcmask 1043459
    %v158 = vsel %vm157, %v153, %v156
    %vm159 = vcmask 1044484
    %v160 = vsel %vm159, %v153, %v158
    %vm161 = vcmask 1045509
    %v162 = vsel %vm161, %v153, %v160
    %vm163 = vcmask 1046534
    %v164 = vsel %vm163, %v153, %v162
    %vm165 = vcmask 1047559
    %v166 = vsel %vm165, %v153, %v164
    %v168 = vmul.f32 %v129, %v166
    %v169 = vmul.f32 %v134, %v166
    %v170 = vld [vmem:[%s1] sm:$0x3]
    %v171 = vlaneseq
    %v172 = vshrl.u32 %v171, 7
    %v173 = vsub.s32 0, %v172
    %v174 = vrot.slane %v170, %v173
    %176 = vbcast.lane.b32.xlu0 %v174, 256
    %v177 = vpop.permute.xlu0 %176
    %v178 = vlaneseq
    %v179 = vshrl.u32 %v178, 7
    %v180 = vsub.s32 1, %v179
    %v181 = vrot.slane %v170, %v180
    %183 = vbcast.lane.b32.xlu0 %v181, 256
    %v184 = vpop.permute.xlu0 %183
    %v187 = vunpack.c.l.s4 1966171168
    %v188 = vunpack.c.0.s8 %v187
    %v189 = vlaneseq
    %v190 = vshrl.u32 %v189, 7
    %v191 = vsub.s32 %v188, %v190
    %v192 = vrot.slane %v170, %v191
    %v193 = vcombine.high %v192, %v192
    %v195 = vunpack.c.l.s4 1966171168
    %v196 = vunpack.c.0.s8 %v195
    %v197 = vlaneseq
    %v198 = vshrl.u32 %v197, 7
    %v199 = vsub.s32 %v196, %v198
    %v200 = vrot.slane %v192, %v199
    %v202 = vunpack.c.l.s4 1966171168
    %v203 = vunpack.c.0.s8 %v202
    %v204 = vlaneseq
    %v205 = vshrl.u32 %v204, 7
    %v206 = vsub.s32 %v203, %v205
    %v207 = vrot.slane %v193, %v206
    %v208 = vlaneseq
    %v209 = vshrl.u32 %v208, 7
    %v210 = vsub.s32 0, %v209
    %v211 = vrot.slane %v200, %v210
    %v212 = vlaneseq
    %v213 = vshrl.u32 %v212, 7
    %v214 = vsub.s32 0, %v213
    %v215 = vrot.slane %v207, %v214
    %v218 = vmul.f32 %v177, %v211
    %v219 = vmul.f32 %v184, %v215
    %v220 = vsub.f32 1.0, %v218
    %v221 = vsub.f32 1.0, %v219
    %v222 = vmul.f32 %v220, -1e+10
    %v223 = vmul.f32 %v221, -1e+10
    %v226 = vcombine.high %v168, %v168
    %v228 = vunpack.c.l.s4 1966171168
    %v229 = vunpack.c.0.s8 %v228
    %v230 = vlaneseq
    %v231 = vshrl.u32 %v230, 7
    %v232 = vsub.s32 %v229, %v231
    %v233 = vrot.slane %v168, %v232
    %v235 = vunpack.c.l.s4 1966171168
    %v236 = vunpack.c.0.s8 %v235
    %v237 = vlaneseq
    %v238 = vshrl.u32 %v237, 7
    %v239 = vsub.s32 %v236, %v238
    %v240 = vrot.slane %v226, %v239
    %v241 = vcombine.high %v233, %v233
    %v242 = vcombine.high %v240, %v240
    %v244 = vunpack.c.l.s4 1966171168
    %v245 = vunpack.c.0.s8 %v244
    %v246 = vlaneseq
    %v247 = vshrl.u32 %v246, 7
    %v248 = vsub.s32 %v245, %v247
    %v249 = vrot.slane %v233, %v248
    %v251 = vunpack.c.l.s4 1966171168
    %v252 = vunpack.c.0.s8 %v251
    %v253 = vlaneseq
    %v254 = vshrl.u32 %v253, 7
    %v255 = vsub.s32 %v252, %v254
    %v256 = vrot.slane %v240, %v255
    %v258 = vunpack.c.l.s4 1966171168
    %v259 = vunpack.c.0.s8 %v258
    %v260 = vlaneseq
    %v261 = vshrl.u32 %v260, 7
    %v262 = vsub.s32 %v259, %v261
    %v263 = vrot.slane %v241, %v262
    %v265 = vunpack.c.l.s4 1966171168
    %v266 = vunpack.c.0.s8 %v265
    %v267 = vlaneseq
    %v268 = vshrl.u32 %v267, 7
    %v269 = vsub.s32 %v266, %v268
    %v270 = vrot.slane %v242, %v269
    %v271 = vcombine.high %v249, %v249
    %v272 = vcombine.high %v256, %v256
    %v273 = vcombine.high %v263, %v263
    %v274 = vcombine.high %v270, %v270
    %v275 = vcombine.high %v169, %v169
    %v277 = vunpack.c.l.s4 1966171168
    %v278 = vunpack.c.0.s8 %v277
    %v279 = vlaneseq
    %v280 = vshrl.u32 %v279, 7
    %v281 = vsub.s32 %v278, %v280
    %v282 = vrot.slane %v169, %v281
    %v284 = vunpack.c.l.s4 1966171168
    %v285 = vunpack.c.0.s8 %v284
    %v286 = vlaneseq
    %v287 = vshrl.u32 %v286, 7
    %v288 = vsub.s32 %v285, %v287
    %v289 = vrot.slane %v275, %v288
    %v290 = vcombine.high %v282, %v282
    %v291 = vcombine.high %v289, %v289
    %v293 = vunpack.c.l.s4 1966171168
    %v294 = vunpack.c.0.s8 %v293
    %v295 = vlaneseq
    %v296 = vshrl.u32 %v295, 7
    %v297 = vsub.s32 %v294, %v296
    %v298 = vrot.slane %v282, %v297
    %v300 = vunpack.c.l.s4 1966171168
    %v301 = vunpack.c.0.s8 %v300
    %v302 = vlaneseq
    %v303 = vshrl.u32 %v302, 7
    %v304 = vsub.s32 %v301, %v303
    %v305 = vrot.slane %v289, %v304
    %v307 = vunpack.c.l.s4 1966171168
    %v308 = vunpack.c.0.s8 %v307
    %v309 = vlaneseq
    %v310 = vshrl.u32 %v309, 7
    %v311 = vsub.s32 %v308, %v310
    %v312 = vrot.slane %v290, %v311
    %v314 = vunpack.c.l.s4 1966171168
    %v315 = vunpack.c.0.s8 %v314
    %v316 = vlaneseq
    %v317 = vshrl.u32 %v316, 7
    %v318 = vsub.s32 %v315, %v317
    %v319 = vrot.slane %v291, %v318
    %v320 = vcombine.high %v298, %v298
    %v321 = vcombine.high %v305, %v305
    %v322 = vcombine.high %v312, %v312
    %v323 = vcombine.high %v319, %v319
    %v324 = vlaneseq
    %v325 = vshrl.u32 %v324, 7
    %v326 = vsub.s32 0, %v325
    %v327 = vrot.slane %v249, %v326
    %v328 = vlaneseq
    %v329 = vshrl.u32 %v328, 7
    %v330 = vsub.s32 0, %v329
    %v331 = vrot.slane %v263, %v330
    %v332 = vlaneseq
    %v333 = vshrl.u32 %v332, 7
    %v334 = vsub.s32 0, %v333
    %v335 = vrot.slane %v271, %v334
    %v336 = vlaneseq
    %v337 = vshrl.u32 %v336, 7
    %v338 = vsub.s32 0, %v337
    %v339 = vrot.slane %v273, %v338
    %v340 = vlaneseq
    %v341 = vshrl.u32 %v340, 7
    %v342 = vsub.s32 0, %v341
    %v343 = vrot.slane %v256, %v342
    %v344 = vlaneseq
    %v345 = vshrl.u32 %v344, 7
    %v346 = vsub.s32 0, %v345
    %v347 = vrot.slane %v270, %v346
    %v348 = vlaneseq
    %v349 = vshrl.u32 %v348, 7
    %v350 = vsub.s32 0, %v349
    %v351 = vrot.slane %v272, %v350
    %v352 = vlaneseq
    %v353 = vshrl.u32 %v352, 7
    %v354 = vsub.s32 0, %v353
    %v355 = vrot.slane %v274, %v354
    %v356 = vlaneseq
    %v357 = vshrl.u32 %v356, 7
    %v358 = vsub.s32 0, %v357
    %v359 = vrot.slane %v298, %v358
    %v360 = vlaneseq
    %v361 = vshrl.u32 %v360, 7
    %v362 = vsub.s32 0, %v361
    %v363 = vrot.slane %v312, %v362
    %v364 = vlaneseq
    %v365 = vshrl.u32 %v364, 7
    %v366 = vsub.s32 0, %v365
    %v367 = vrot.slane %v320, %v366
    %v368 = vlaneseq
    %v369 = vshrl.u32 %v368, 7
    %v370 = vsub.s32 0, %v369
    %v371 = vrot.slane %v322, %v370
    %v372 = vlaneseq
    %v373 = vshrl.u32 %v372, 7
    %v374 = vsub.s32 0, %v373
    %v375 = vrot.slane %v305, %v374
    %v376 = vlaneseq
    %v377 = vshrl.u32 %v376, 7
    %v378 = vsub.s32 0, %v377
    %v379 = vrot.slane %v319, %v378
    %v380 = vlaneseq
    %v381 = vshrl.u32 %v380, 7
    %v382 = vsub.s32 0, %v381
    %v383 = vrot.slane %v321, %v382
    %v384 = vlaneseq
    %v385 = vshrl.u32 %v384, 7
    %v386 = vsub.s32 0, %v385
    %v387 = vrot.slane %v323, %v386
    %v404 = vmul.f32 %v327, %v139
    %v405 = vmul.f32 %v331, %v139
    %v406 = vmul.f32 %v335, %v139
    %v407 = vmul.f32 %v339, %v139
    %v408 = vmul.f32 %v343, %v139
    %v409 = vmul.f32 %v347, %v139
    %v410 = vmul.f32 %v351, %v139
    %v411 = vmul.f32 %v355, %v139
    %v412 = vmul.f32 %v359, %v144
    %v413 = vmul.f32 %v363, %v144
    %v414 = vmul.f32 %v367, %v144
    %v415 = vmul.f32 %v371, %v144
    %v416 = vmul.f32 %v375, %v144
    %v417 = vmul.f32 %v379, %v144
    %v418 = vmul.f32 %v383, %v144
    %v419 = vmul.f32 %v387, %v144
    %v420 = vlaneseq
    %v421 = vshrl.u32 %v420, 7
    %v422 = vsub.s32 0, %v421
    %v423 = vrot.slane %v222, %v422
    %s425 = sor.u32 256, 8
    %426 = vbcast.lane.b32.xlu0 %v423, %s425
    %v427 = vpop.permute.xlu0 %426
    %v428 = vlaneseq
    %v429 = vshrl.u32 %v428, 7
    %v430 = vsub.s32 1, %v429
    %v431 = vrot.slane %v222, %v430
    %s433 = sor.u32 256, 8
    %434 = vbcast.lane.b32.xlu0 %v431, %s433
    %v435 = vpop.permute.xlu0 %434
    %v436 = vlaneseq
    %v437 = vshrl.u32 %v436, 7
    %v438 = vsub.s32 2, %v437
    %v439 = vrot.slane %v222, %v438
    %s441 = sor.u32 256, 8
    %442 = vbcast.lane.b32.xlu0 %v439, %s441
    %v443 = vpop.permute.xlu0 %442
    %v444 = vlaneseq
    %v445 = vshrl.u32 %v444, 7
    %v446 = vsub.s32 3, %v445
    %v447 = vrot.slane %v222, %v446
    %s449 = sor.u32 256, 8
    %450 = vbcast.lane.b32.xlu0 %v447, %s449
    %v451 = vpop.permute.xlu0 %450
    %v452 = vlaneseq
    %v453 = vshrl.u32 %v452, 7
    %v454 = vsub.s32 4, %v453
    %v455 = vrot.slane %v222, %v454
    %s457 = sor.u32 256, 8
    %458 = vbcast.lane.b32.xlu0 %v455, %s457
    %v459 = vpop.permute.xlu0 %458
    %v460 = vlaneseq
    %v461 = vshrl.u32 %v460, 7
    %v462 = vsub.s32 5, %v461
    %v463 = vrot.slane %v222, %v462
    %s465 = sor.u32 256, 8
    %466 = vbcast.lane.b32.xlu0 %v463, %s465
    %v467 = vpop.permute.xlu0 %466
    %v468 = vlaneseq
    %v469 = vshrl.u32 %v468, 7
    %v470 = vsub.s32 6, %v469
    %v471 = vrot.slane %v222, %v470
    %s473 = sor.u32 256, 8
    %474 = vbcast.lane.b32.xlu0 %v471, %s473
    %v475 = vpop.permute.xlu0 %474
    %v476 = vlaneseq
    %v477 = vshrl.u32 %v476, 7
    %v478 = vsub.s32 7, %v477
    %v479 = vrot.slane %v222, %v478
    %s481 = sor.u32 256, 8
    %482 = vbcast.lane.b32.xlu0 %v479, %s481
    %v483 = vpop.permute.xlu0 %482
    %v484 = vlaneseq
    %v485 = vshrl.u32 %v484, 7
    %v486 = vsub.s32 0, %v485
    %v487 = vrot.slane %v223, %v486
    %s489 = sor.u32 256, 8
    %490 = vbcast.lane.b32.xlu0 %v487, %s489
    %v491 = vpop.permute.xlu0 %490
    %v492 = vlaneseq
    %v493 = vshrl.u32 %v492, 7
    %v494 = vsub.s32 1, %v493
    %v495 = vrot.slane %v223, %v494
    %s497 = sor.u32 256, 8
    %498 = vbcast.lane.b32.xlu0 %v495, %s497
    %v499 = vpop.permute.xlu0 %498
    %v500 = vlaneseq
    %v501 = vshrl.u32 %v500, 7
    %v502 = vsub.s32 2, %v501
    %v503 = vrot.slane %v223, %v502
    %s505 = sor.u32 256, 8
    %506 = vbcast.lane.b32.xlu0 %v503, %s505
    %v507 = vpop.permute.xlu0 %506
    %v508 = vlaneseq
    %v509 = vshrl.u32 %v508, 7
    %v510 = vsub.s32 3, %v509
    %v511 = vrot.slane %v223, %v510
    %s513 = sor.u32 256, 8
    %514 = vbcast.lane.b32.xlu0 %v511, %s513
    %v515 = vpop.permute.xlu0 %514
    %v516 = vlaneseq
    %v517 = vshrl.u32 %v516, 7
    %v518 = vsub.s32 4, %v517
    %v519 = vrot.slane %v223, %v518
    %s521 = sor.u32 256, 8
    %522 = vbcast.lane.b32.xlu0 %v519, %s521
    %v523 = vpop.permute.xlu0 %522
    %v524 = vlaneseq
    %v525 = vshrl.u32 %v524, 7
    %v526 = vsub.s32 5, %v525
    %v527 = vrot.slane %v223, %v526
    %s529 = sor.u32 256, 8
    %530 = vbcast.lane.b32.xlu0 %v527, %s529
    %v531 = vpop.permute.xlu0 %530
    %v532 = vlaneseq
    %v533 = vshrl.u32 %v532, 7
    %v534 = vsub.s32 6, %v533
    %v535 = vrot.slane %v223, %v534
    %s537 = sor.u32 256, 8
    %538 = vbcast.lane.b32.xlu0 %v535, %s537
    %v539 = vpop.permute.xlu0 %538
    %v540 = vlaneseq
    %v541 = vshrl.u32 %v540, 7
    %v542 = vsub.s32 7, %v541
    %v543 = vrot.slane %v223, %v542
    %s545 = sor.u32 256, 8
    %546 = vbcast.lane.b32.xlu0 %v543, %s545
    %v547 = vpop.permute.xlu0 %546
    %v548 = vadd.f32 %v404, %v427
    %v549 = vadd.f32 %v405, %v435
    %v550 = vadd.f32 %v406, %v443
    %v551 = vadd.f32 %v407, %v451
    %v552 = vadd.f32 %v408, %v459
    %v553 = vadd.f32 %v409, %v467
    %v554 = vadd.f32 %v410, %v475
    %v555 = vadd.f32 %v411, %v483
    %v556 = vadd.f32 %v412, %v491
    %v557 = vadd.f32 %v413, %v499
    %v558 = vadd.f32 %v414, %v507
    %v559 = vadd.f32 %v415, %v515
    %v560 = vadd.f32 %v416, %v523
    %v561 = vadd.f32 %v417, %v531
    %v562 = vadd.f32 %v418, %v539
    %v563 = vadd.f32 %v419, %v547
    %vm564 = vcmask 31744
    %v565 = vsel %vm564, %v548, -inf
    %v566 = vrot.slane %v565, 4
    %v567 = vmax.f32 %v565, %v566
    %v568 = vrot.slane %v567, 2
    %v569 = vmax.f32 %v567, %v568
    %v570 = vrot.slane %v569, 1
    %v571 = vmax.f32 %v569, %v570
    %v572 = vsel %vm564, %v549, -inf
    %v573 = vrot.slane %v572, 4
    %v574 = vmax.f32 %v572, %v573
    %v575 = vrot.slane %v574, 2
    %v576 = vmax.f32 %v574, %v575
    %v577 = vrot.slane %v576, 1
    %v578 = vmax.f32 %v576, %v577
    %v579 = vsel %vm564, %v550, -inf
    %v580 = vrot.slane %v579, 4
    %v581 = vmax.f32 %v579, %v580
    %v582 = vrot.slane %v581, 2
    %v583 = vmax.f32 %v581, %v582
    %v584 = vrot.slane %v583, 1
    %v585 = vmax.f32 %v583, %v584
    %v586 = vsel %vm564, %v551, -inf
    %v587 = vrot.slane %v586, 4
    %v588 = vmax.f32 %v586, %v587
    %v589 = vrot.slane %v588, 2
    %v590 = vmax.f32 %v588, %v589
    %v591 = vrot.slane %v590, 1
    %v592 = vmax.f32 %v590, %v591
    %v593 = vsel %vm564, %v552, -inf
    %v594 = vrot.slane %v593, 4
    %v595 = vmax.f32 %v593, %v594
    %v596 = vrot.slane %v595, 2
    %v597 = vmax.f32 %v595, %v596
    %v598 = vrot.slane %v597, 1
    %v599 = vmax.f32 %v597, %v598
    %v600 = vsel %vm564, %v553, -inf
    %v601 = vrot.slane %v600, 4
    %v602 = vmax.f32 %v600, %v601
    %v603 = vrot.slane %v602, 2
    %v604 = vmax.f32 %v602, %v603
    %v605 = vrot.slane %v604, 1
    %v606 = vmax.f32 %v604, %v605
    %v607 = vsel %vm564, %v554, -inf
    %v608 = vrot.slane %v607, 4
    %v609 = vmax.f32 %v607, %v608
    %v610 = vrot.slane %v609, 2
    %v611 = vmax.f32 %v609, %v610
    %v612 = vrot.slane %v611, 1
    %v613 = vmax.f32 %v611, %v612
    %v614 = vsel %vm564, %v555, -inf
    %v615 = vrot.slane %v614, 4
    %v616 = vmax.f32 %v614, %v615
    %v617 = vrot.slane %v616, 2
    %v618 = vmax.f32 %v616, %v617
    %v619 = vrot.slane %v618, 1
    %v620 = vmax.f32 %v618, %v619
    %v621 = vsel %vm564, %v556, -inf
    %v622 = vrot.slane %v621, 4
    %v623 = vmax.f32 %v621, %v622
    %v624 = vrot.slane %v623, 2
    %v625 = vmax.f32 %v623, %v624
    %v626 = vrot.slane %v625, 1
    %v627 = vmax.f32 %v625, %v626
    %v628 = vsel %vm564, %v557, -inf
    %v629 = vrot.slane %v628, 4
    %v630 = vmax.f32 %v628, %v629
    %v631 = vrot.slane %v630, 2
    %v632 = vmax.f32 %v630, %v631
    %v633 = vrot.slane %v632, 1
    %v634 = vmax.f32 %v632, %v633
    %v635 = vsel %vm564, %v558, -inf
    %v636 = vrot.slane %v635, 4
    %v637 = vmax.f32 %v635, %v636
    %v638 = vrot.slane %v637, 2
    %v639 = vmax.f32 %v637, %v638
    %v640 = vrot.slane %v639, 1
    %v641 = vmax.f32 %v639, %v640
    %v642 = vsel %vm564, %v559, -inf
    %v643 = vrot.slane %v642, 4
    %v644 = vmax.f32 %v642, %v643
    %v645 = vrot.slane %v644, 2
    %v646 = vmax.f32 %v644, %v645
    %v647 = vrot.slane %v646, 1
    %v648 = vmax.f32 %v646, %v647
    %v649 = vsel %vm564, %v560, -inf
    %v650 = vrot.slane %v649, 4
    %v651 = vmax.f32 %v649, %v650
    %v652 = vrot.slane %v651, 2
    %v653 = vmax.f32 %v651, %v652
    %v654 = vrot.slane %v653, 1
    %v655 = vmax.f32 %v653, %v654
    %v656 = vsel %vm564, %v561, -inf
    %v657 = vrot.slane %v656, 4
    %v658 = vmax.f32 %v656, %v657
    %v659 = vrot.slane %v658, 2
    %v660 = vmax.f32 %v658, %v659
    %v661 = vrot.slane %v660, 1
    %v662 = vmax.f32 %v660, %v661
    %v663 = vsel %vm564, %v562, -inf
    %v664 = vrot.slane %v663, 4
    %v665 = vmax.f32 %v663, %v664
    %v666 = vrot.slane %v665, 2
    %v667 = vmax.f32 %v665, %v666
    %v668 = vrot.slane %v667, 1
    %v669 = vmax.f32 %v667, %v668
    %v670 = vsel %vm564, %v563, -inf
    %v671 = vrot.slane %v670, 4
    %v672 = vmax.f32 %v670, %v671
    %v673 = vrot.slane %v672, 2
    %v674 = vmax.f32 %v672, %v673
    %v675 = vrot.slane %v674, 1
    %v676 = vmax.f32 %v674, %v675
    %v677 = vsub.f32 %v548, %v571
    %v678 = vsub.f32 %v549, %v578
    %v679 = vsub.f32 %v550, %v585
    %v680 = vsub.f32 %v551, %v592
    %v681 = vsub.f32 %v552, %v599
    %v682 = vsub.f32 %v553, %v606
    %v683 = vsub.f32 %v554, %v613
    %v684 = vsub.f32 %v555, %v620
    %v685 = vsub.f32 %v556, %v627
    %v686 = vsub.f32 %v557, %v634
    %v687 = vsub.f32 %v558, %v641
    %v688 = vsub.f32 %v559, %v648
    %v689 = vsub.f32 %v560, %v655
    %v690 = vsub.f32 %v561, %v662
    %v691 = vsub.f32 %v562, %v669
    %v692 = vsub.f32 %v563, %v676
    %v693 = vmul.f32 %v677, 1.442695
    %v694 = vpow.pop %v693
    %v695 = vmul.f32 %v678, 1.442695
    %v696 = vpow.pop %v695
    %v697 = vmul.f32 %v679, 1.442695
    %v698 = vpow.pop %v697
    %v699 = vmul.f32 %v680, 1.442695
    %v700 = vpow.pop %v699
    %v701 = vmul.f32 %v681, 1.442695
    %v702 = vpow.pop %v701
    %v703 = vmul.f32 %v682, 1.442695
    %v704 = vpow.pop %v703
    %v705 = vmul.f32 %v683, 1.442695
    %v706 = vpow.pop %v705
    %v707 = vmul.f32 %v684, 1.442695
    %v708 = vpow.pop %v707
    %v709 = vmul.f32 %v685, 1.442695
    %v710 = vpow.pop %v709
    %v711 = vmul.f32 %v686, 1.442695
    %v712 = vpow.pop %v711
    %v713 = vmul.f32 %v687, 1.442695
    %v714 = vpow.pop %v713
    %v715 = vmul.f32 %v688, 1.442695
    %v716 = vpow.pop %v715
    %v717 = vmul.f32 %v689, 1.442695
    %v718 = vpow.pop %v717
    %v719 = vmul.f32 %v690, 1.442695
    %v720 = vpow.pop %v719
    %v721 = vmul.f32 %v691, 1.442695
    %v722 = vpow.pop %v721
    %v723 = vmul.f32 %v692, 1.442695
    %v724 = vpow.pop %v723
    %v725 = vsel %vm564, %v694, 0.0
    %v726 = vrot.slane %v725, 4
    %v727 = vadd.f32 %v725, %v726
    %v728 = vrot.slane %v727, 2
    %v729 = vadd.f32 %v727, %v728
    %v730 = vrot.slane %v729, 1
    %v731 = vadd.f32 %v729, %v730
    %v732 = vsel %vm564, %v696, 0.0
    %v733 = vrot.slane %v732, 4
    %v734 = vadd.f32 %v732, %v733
    %v735 = vrot.slane %v734, 2
    %v736 = vadd.f32 %v734, %v735
    %v737 = vrot.slane %v736, 1
    %v738 = vadd.f32 %v736, %v737
    %v739 = vsel %vm564, %v698, 0.0
    %v740 = vrot.slane %v739, 4
    %v741 = vadd.f32 %v739, %v740
    %v742 = vrot.slane %v741, 2
    %v743 = vadd.f32 %v741, %v742
    %v744 = vrot.slane %v743, 1
    %v745 = vadd.f32 %v743, %v744
    %v746 = vsel %vm564, %v700, 0.0
    %v747 = vrot.slane %v746, 4
    %v748 = vadd.f32 %v746, %v747
    %v749 = vrot.slane %v748, 2
    %v750 = vadd.f32 %v748, %v749
    %v751 = vrot.slane %v750, 1
    %v752 = vadd.f32 %v750, %v751
    %v753 = vsel %vm564, %v702, 0.0
    %v754 = vrot.slane %v753, 4
    %v755 = vadd.f32 %v753, %v754
    %v756 = vrot.slane %v755, 2
    %v757 = vadd.f32 %v755, %v756
    %v758 = vrot.slane %v757, 1
    %v759 = vadd.f32 %v757, %v758
    %v760 = vsel %vm564, %v704, 0.0
    %v761 = vrot.slane %v760, 4
    %v762 = vadd.f32 %v760, %v761
    %v763 = vrot.slane %v762, 2
    %v764 = vadd.f32 %v762, %v763
    %v765 = vrot.slane %v764, 1
    %v766 = vadd.f32 %v764, %v765
    %v767 = vsel %vm564, %v706, 0.0
    %v768 = vrot.slane %v767, 4
    %v769 = vadd.f32 %v767, %v768
    %v770 = vrot.slane %v769, 2
    %v771 = vadd.f32 %v769, %v770
    %v772 = vrot.slane %v771, 1
    %v773 = vadd.f32 %v771, %v772
    %v774 = vsel %vm564, %v708, 0.0
    %v775 = vrot.slane %v774, 4
    %v776 = vadd.f32 %v774, %v775
    %v777 = vrot.slane %v776, 2
    %v778 = vadd.f32 %v776, %v777
    %v779 = vrot.slane %v778, 1
    %v780 = vadd.f32 %v778, %v779
    %v781 = vsel %vm564, %v710, 0.0
    %v782 = vrot.slane %v781, 4
    %v783 = vadd.f32 %v781, %v782
    %v784 = vrot.slane %v783, 2
    %v785 = vadd.f32 %v783, %v784
    %v786 = vrot.slane %v785, 1
    %v787 = vadd.f32 %v785, %v786
    %v788 = vsel %vm564, %v712, 0.0
    %v789 = vrot.slane %v788, 4
    %v790 = vadd.f32 %v788, %v789
    %v791 = vrot.slane %v790, 2
    %v792 = vadd.f32 %v790, %v791
    %v793 = vrot.slane %v792, 1
    %v794 = vadd.f32 %v792, %v793
    %v795 = vsel %vm564, %v714, 0.0
    %v796 = vrot.slane %v795, 4
    %v797 = vadd.f32 %v795, %v796
    %v798 = vrot.slane %v797, 2
    %v799 = vadd.f32 %v797, %v798
    %v800 = vrot.slane %v799, 1
    %v801 = vadd.f32 %v799, %v800
    %v802 = vsel %vm564, %v716, 0.0
    %v803 = vrot.slane %v802, 4
    %v804 = vadd.f32 %v802, %v803
    %v805 = vrot.slane %v804, 2
    %v806 = vadd.f32 %v804, %v805
    %v807 = vrot.slane %v806, 1
    %v808 = vadd.f32 %v806, %v807
    %v809 = vsel %vm564, %v718, 0.0
    %v810 = vrot.slane %v809, 4
    %v811 = vadd.f32 %v809, %v810
    %v812 = vrot.slane %v811, 2
    %v813 = vadd.f32 %v811, %v812
    %v814 = vrot.slane %v813, 1
    %v815 = vadd.f32 %v813, %v814
    %v816 = vsel %vm564, %v720, 0.0
    %v817 = vrot.slane %v816, 4
    %v818 = vadd.f32 %v816, %v817
    %v819 = vrot.slane %v818, 2
    %v820 = vadd.f32 %v818, %v819
    %v821 = vrot.slane %v820, 1
    %v822 = vadd.f32 %v820, %v821
    %v823 = vsel %vm564, %v722, 0.0
    %v824 = vrot.slane %v823, 4
    %v825 = vadd.f32 %v823, %v824
    %v826 = vrot.slane %v825, 2
    %v827 = vadd.f32 %v825, %v826
    %v828 = vrot.slane %v827, 1
    %v829 = vadd.f32 %v827, %v828
    %v830 = vsel %vm564, %v724, 0.0
    %v831 = vrot.slane %v830, 4
    %v832 = vadd.f32 %v830, %v831
    %v833 = vrot.slane %v832, 2
    %v834 = vadd.f32 %v832, %v833
    %v835 = vrot.slane %v834, 1
    %v836 = vadd.f32 %v834, %v835
    %v837 = vrcp.pop %v731
    %v838 = vrcp.pop %v738
    %v839 = vrcp.pop %v745
    %v840 = vrcp.pop %v752
    %v841 = vrcp.pop %v759
    %v842 = vrcp.pop %v766
    %v843 = vrcp.pop %v773
    %v844 = vrcp.pop %v780
    %v845 = vrcp.pop %v787
    %v846 = vrcp.pop %v794
    %v847 = vrcp.pop %v801
    %v848 = vrcp.pop %v808
    %v849 = vrcp.pop %v815
    %v850 = vrcp.pop %v822
    %v851 = vrcp.pop %v829
    %v852 = vrcp.pop %v836
    %v853 = vmul.f32 %v694, %v837
    %v854 = vmul.f32 %v696, %v838
    %v855 = vmul.f32 %v698, %v839
    %v856 = vmul.f32 %v700, %v840
    %v857 = vmul.f32 %v702, %v841
    %v858 = vmul.f32 %v704, %v842
    %v859 = vmul.f32 %v706, %v843
    %v860 = vmul.f32 %v708, %v844
    %v861 = vmul.f32 %v710, %v845
    %v862 = vmul.f32 %v712, %v846
    %v863 = vmul.f32 %v714, %v847
    %v864 = vmul.f32 %v716, %v848
    %v865 = vmul.f32 %v718, %v849
    %v866 = vmul.f32 %v720, %v850
    %v867 = vmul.f32 %v722, %v851
    %v868 = vmul.f32 %v724, %v852
    %v869 = vmul.f32 %v853, %v139
    %v870 = vmul.f32 %v854, %v139
    %v871 = vmul.f32 %v855, %v139
    %v872 = vmul.f32 %v856, %v139
    %v873 = vmul.f32 %v857, %v139
    %v874 = vmul.f32 %v858, %v139
    %v875 = vmul.f32 %v859, %v139
    %v876 = vmul.f32 %v860, %v139
    %v877 = vmul.f32 %v861, %v144
    %v878 = vmul.f32 %v862, %v144
    %v879 = vmul.f32 %v863, %v144
    %v880 = vmul.f32 %v864, %v144
    %v881 = vmul.f32 %v865, %v144
    %v882 = vmul.f32 %v866, %v144
    %v883 = vmul.f32 %v867, %v144
    %v884 = vmul.f32 %v868, %v144
    %v885 = vsel %vm564, %v869, 0.0
    %v886 = vrot.slane %v885, 4
    %v887 = vadd.f32 %v885, %v886
    %v888 = vrot.slane %v887, 2
    %v889 = vadd.f32 %v887, %v888
    %v890 = vrot.slane %v889, 1
    %v891 = vadd.f32 %v889, %v890
    %v892 = vsel %vm564, %v870, 0.0
    %v893 = vrot.slane %v892, 4
    %v894 = vadd.f32 %v892, %v893
    %v895 = vrot.slane %v894, 2
    %v896 = vadd.f32 %v894, %v895
    %v897 = vrot.slane %v896, 1
    %v898 = vadd.f32 %v896, %v897
    %v899 = vsel %vm564, %v871, 0.0
    %v900 = vrot.slane %v899, 4
    %v901 = vadd.f32 %v899, %v900
    %v902 = vrot.slane %v901, 2
    %v903 = vadd.f32 %v901, %v902
    %v904 = vrot.slane %v903, 1
    %v905 = vadd.f32 %v903, %v904
    %v906 = vsel %vm564, %v872, 0.0
    %v907 = vrot.slane %v906, 4
    %v908 = vadd.f32 %v906, %v907
    %v909 = vrot.slane %v908, 2
    %v910 = vadd.f32 %v908, %v909
    %v911 = vrot.slane %v910, 1
    %v912 = vadd.f32 %v910, %v911
    %v913 = vsel %vm564, %v873, 0.0
    %v914 = vrot.slane %v913, 4
    %v915 = vadd.f32 %v913, %v914
    %v916 = vrot.slane %v915, 2
    %v917 = vadd.f32 %v915, %v916
    %v918 = vrot.slane %v917, 1
    %v919 = vadd.f32 %v917, %v918
    %v920 = vsel %vm564, %v874, 0.0
    %v921 = vrot.slane %v920, 4
    %v922 = vadd.f32 %v920, %v921
    %v923 = vrot.slane %v922, 2
    %v924 = vadd.f32 %v922, %v923
    %v925 = vrot.slane %v924, 1
    %v926 = vadd.f32 %v924, %v925
    %v927 = vsel %vm564, %v875, 0.0
    %v928 = vrot.slane %v927, 4
    %v929 = vadd.f32 %v927, %v928
    %v930 = vrot.slane %v929, 2
    %v931 = vadd.f32 %v929, %v930
    %v932 = vrot.slane %v931, 1
    %v933 = vadd.f32 %v931, %v932
    %v934 = vsel %vm564, %v876, 0.0
    %v935 = vrot.slane %v934, 4
    %v936 = vadd.f32 %v934, %v935
    %v937 = vrot.slane %v936, 2
    %v938 = vadd.f32 %v936, %v937
    %v939 = vrot.slane %v938, 1
    %v940 = vadd.f32 %v938, %v939
    %v941 = vsel %vm564, %v877, 0.0
    %v942 = vrot.slane %v941, 4
    %v943 = vadd.f32 %v941, %v942
    %v944 = vrot.slane %v943, 2
    %v945 = vadd.f32 %v943, %v944
    %v946 = vrot.slane %v945, 1
    %v947 = vadd.f32 %v945, %v946
    %v948 = vsel %vm564, %v878, 0.0
    %v949 = vrot.slane %v948, 4
    %v950 = vadd.f32 %v948, %v949
    %v951 = vrot.slane %v950, 2
    %v952 = vadd.f32 %v950, %v951
    %v953 = vrot.slane %v952, 1
    %v954 = vadd.f32 %v952, %v953
    %v955 = vsel %vm564, %v879, 0.0
    %v956 = vrot.slane %v955, 4
    %v957 = vadd.f32 %v955, %v956
    %v958 = vrot.slane %v957, 2
    %v959 = vadd.f32 %v957, %v958
    %v960 = vrot.slane %v959, 1
    %v961 = vadd.f32 %v959, %v960
    %v962 = vsel %vm564, %v880, 0.0
    %v963 = vrot.slane %v962, 4
    %v964 = vadd.f32 %v962, %v963
    %v965 = vrot.slane %v964, 2
    %v966 = vadd.f32 %v964, %v965
    %v967 = vrot.slane %v966, 1
    %v968 = vadd.f32 %v966, %v967
    %v969 = vsel %vm564, %v881, 0.0
    %v970 = vrot.slane %v969, 4
    %v971 = vadd.f32 %v969, %v970
    %v972 = vrot.slane %v971, 2
    %v973 = vadd.f32 %v971, %v972
    %v974 = vrot.slane %v973, 1
    %v975 = vadd.f32 %v973, %v974
    %v976 = vsel %vm564, %v882, 0.0
    %v977 = vrot.slane %v976, 4
    %v978 = vadd.f32 %v976, %v977
    %v979 = vrot.slane %v978, 2
    %v980 = vadd.f32 %v978, %v979
    %v981 = vrot.slane %v980, 1
    %v982 = vadd.f32 %v980, %v981
    %v983 = vsel %vm564, %v883, 0.0
    %v984 = vrot.slane %v983, 4
    %v985 = vadd.f32 %v983, %v984
    %v986 = vrot.slane %v985, 2
    %v987 = vadd.f32 %v985, %v986
    %v988 = vrot.slane %v987, 1
    %v989 = vadd.f32 %v987, %v988
    %v990 = vsel %vm564, %v884, 0.0
    %v991 = vrot.slane %v990, 4
    %v992 = vadd.f32 %v990, %v991
    %v993 = vrot.slane %v992, 2
    %v994 = vadd.f32 %v992, %v993
    %v995 = vrot.slane %v994, 1
    %v996 = vadd.f32 %v994, %v995
    %v1013 = vsel %vm154, %v898, %v891
    %v1014 = vsel %vm155, %v905, %v1013
    %v1015 = vsel %vm157, %v912, %v1014
    %v1016 = vsel %vm159, %v919, %v1015
    %v1017 = vsel %vm161, %v926, %v1016
    %v1018 = vsel %vm163, %v933, %v1017
    %v1019 = vsel %vm165, %v940, %v1018
    %v1020 = vsel %vm154, %v954, %v947
    %v1021 = vsel %vm155, %v961, %v1020
    %v1022 = vsel %vm157, %v968, %v1021
    %v1023 = vsel %vm159, %v975, %v1022
    %v1024 = vsel %vm161, %v982, %v1023
    %v1025 = vsel %vm163, %v989, %v1024
    %v1026 = vsel %vm165, %v996, %v1025
    %v1027 = vsel %vm564, %v1019, 0
    %v1029 = vsel %vm564, %v1026, 0
    %vm1031 = vcmask 1043456
    %v1032 = vsel %vm1031, %v37, 0
    %1034 = vmatprep.subr.mxu0 0.0
    %1035 = vmatpush1.msra.mxu0 %v1032
    %1036 = vmatprep.subr.mxu0 0.0
    %1037 = vmatpush1.msra.mxu0 0.0
    %1038 = vmatprep.subr.mxu0 0.0
    %1039 = vmatpush1.msra.mxu0 0.0
    %1040 = vmatprep.subr.mxu0 0.0
    %1041 = vmatpush1.msra.mxu0 0.0
    %1042 = vmatprep.subr.mxu0 0.0
    %1043 = vmatpush1.msra.mxu0 0.0
    %1044 = vmatprep.subr.mxu0 0.0
    %1045 = vmatpush1.msra.mxu0 0.0
    %1046 = vmatprep.subr.mxu0 0.0
    %1047 = vmatpush1.msra.mxu0 0.0
    %1048 = vmatprep.subr.mxu0 0.0
    %1049 = vmatpush1.msra.mxu0 0.0
    %1050 = vmatprep.subr.mxu0 0.0
    %1051 = vmatpush1.msra.mxu0 0.0
    %1052 = vmatprep.subr.mxu0 0.0
    %1053 = vmatpush1.msra.mxu0 0.0
    %1054 = vmatprep.subr.mxu0 0.0
    %1055 = vmatpush1.msra.mxu0 0.0
    %1056 = vmatprep.subr.mxu0 0.0
    %1057 = vmatpush1.msra.mxu0 0.0
    %1058 = vmatprep.subr.mxu0 0.0
    %1059 = vmatpush1.msra.mxu0 0.0
    %1060 = vmatprep.subr.mxu0 0.0
    %1061 = vmatpush1.msra.mxu0 0.0
    %1062 = vmatprep.subr.mxu0 0.0
    %1063 = vmatpush1.msra.mxu0 0.0
    %1064 = vmatprep.subr.mxu0 0.0
    %1065 = vmatpush1.msra.mxu0 0.0
    %1066 = vmatprep.subr.mxu0 0.0
    %1067 = vmatpush1.msra.mxu0 0.0
    %1068 = vmatprep.subr.mxu0 0.0
    %1069 = vmatpush1.msra.mxu0 0.0
    %1070 = vmatprep.subr.mxu0 0.0
    %1071 = vmatpush1.msra.mxu0 0.0
    %1072 = vmatprep.subr.mxu0 0.0
    %1073 = vmatpush1.msra.mxu0 0.0
    %1074 = vmatprep.subr.mxu0 0.0
    %1075 = vmatpush1.msra.mxu0 0.0
    %1076 = vmatprep.subr.mxu0 0.0
    %1077 = vmatpush1.msra.mxu0 0.0
    %1078 = vmatprep.subr.mxu0 0.0
    %1079 = vmatpush1.msra.mxu0 0.0
    %1080 = vmatprep.subr.mxu0 0.0
    %1081 = vmatpush1.msra.mxu0 0.0
    %1082 = vmatprep.subr.mxu0 0.0
    %1083 = vmatpush1.msra.mxu0 0.0
    %1084 = vmatprep.subr.mxu0 0.0
    %1085 = vmatpush1.msra.mxu0 0.0
    %1086 = vmatprep.subr.mxu0 0.0
    %1087 = vmatpush1.msra.mxu0 0.0
    %1088 = vmatprep.subr.mxu0 0.0
    %1089 = vmatpush1.msra.mxu0 0.0
    %1090 = vmatprep.subr.mxu0 0.0
    %1091 = vmatpush1.msra.mxu0 0.0
    %1092 = vmatprep.subr.mxu0 0.0
    %1093 = vmatpush1.msra.mxu0 0.0
    %1094 = vmatprep.subr.mxu0 0.0
    %1095 = vmatpush1.msra.mxu0 0.0
    %1096 = vmatprep.subr.mxu0 0.0
    %1097 = vmatpush1.msra.mxu0 0.0
    %1098 = vmatprep.mubr.f32.mxu0 0.0
    %1099 = vmatmul.mubr.f32.gmra.mrb[0].mxu0 %v1027
    %v1100 = vpop.f32.mrb[0].mxu0
    %v1101 = vadd.f32 0.0, %v1100
    %v1102 = vpop.f32.mrb[0].mxu0
    %1103 = vmatprep.mubr.f32.mxu0 0.0
    %1104 = vmatmul.mubr.f32.gmra.mrb[0].mxu0 %v1029
    %v1105 = vpop.f32.mrb[0].mxu0
    %v1106 = vadd.f32 0.0, %v1105
    %v1107 = vpop.f32.mrb[0].mxu0
    %1108 = vdwg.mxu0
    %1109 = vst.msk [vmem:[#allocation5] sm:$0xff] %vm46, %v1101
    %1110 = vst.msk [vmem:[#allocation5 + $0x8] sm:$0xff] %vm46, %v1106
    // Predicated region
    $region18: #{tpu_custom_call.1} parent=1 // pred_check
      _
    $region19: #{tpu_custom_call.1} parent=1 // pred_check_branch
      %1112 = sbr.rel (0) target = $region21
    $region20: #{tpu_custom_call.1} parent=1 // pred_region
      %s1114 = ssub.s32 256, 256
      %1115 = vsyncadd [#allocation4], %s1114
      %s1116 = sshll.u32 [#allocation5], 4
      %s1117 = int_to_ptr.vmem [resolvable:$true] %s1116
      %1122 = dma.vmem_to_hbm [thread:$0]  %s1117, 256, %s3, [#allocation4], 128, 128, 8
    $region21: #{tpu_custom_call.1} parent=1 // pred_fallthru
      _
    // Predicated region
    $region22: #{tpu_custom_call.1} parent=1 // pred_check
      _
    $region23: #{tpu_custom_call.1} parent=1 // pred_check_branch
      %1124 = sbr.rel (0) target = $region25
    $region24: #{tpu_custom_call.1} parent=1 // pred_region
      %1125 = dma.done [#allocation4], 256
    $region25: #{tpu_custom_call.1} parent=1 // pred_fallthru
      _
    %1126 = vsyncpa [#allocation3], 1
    %1127 = vsyncpa [#allocation4], 1

</llo_original>
